<compile_context>
chip_gen: v7x
topology: tpu7x:2x2x1
jax: 0.10.0
libtpu: 0.0.40
codegen_flags: <defaults>
</compile_context>

<pallas_src>
import functools

import jax
import jax.numpy as jnp
from jax.experimental import pallas as pl
from jax.experimental.pallas import tpu as pltpu


# Above the default scoped limits on v5e (16 MiB) / v6e (32 MiB), below v7x's
# 64 MiB physical VMEM.
_VMEM_LIMIT_BYTES = 48 * 1024 * 1024


def _pos_tile(n):
    """Tile size for the position axis and the (possibly padded) axis length."""
    for t in (256, 128):          # 256 fills the v6e/v7x 256x256 MXU
        if n % t == 0:
            return t, n
    if n <= 512:                  # small axis: a single full block is cheap
        return n, n
    t = 128                       # large, non-aligned: pad to a 128 multiple
    return t, ((n + t - 1) // t) * t


# ---------------------------------------------------------------------------
# Kernel 1: fused theta/phi/g 1x1-conv projections.
#   Reads v blocks in native (1, D, TN) layout, does one (TN, D)x(D, 3C) bf16
#   GEMM (D contracted via dot_general), writes three channels-last bf16
#   outputs.  1/N is pre-folded into the theta columns of the weight/bias.
# ---------------------------------------------------------------------------
def _proj_kernel(v_ref, w_ref, b_ref, th_ref, ph_ref, g_ref, *, c):
    x = v_ref[0].astype(jnp.bfloat16)                      # (D, TN)
    acc = jax.lax.dot_general(
        x, w_ref[...], (((0,), (0,)), ((), ())),
        preferred_element_type=jnp.float32)                # (TN, 3C) f32
    acc = acc + b_ref[...]                                 # (1, 3C) f32 bias
    th_ref[0] = acc[:, :c].astype(th_ref.dtype)
    ph_ref[0] = acc[:, c:2 * c].astype(ph_ref.dtype)
    g_ref[0] = acc[:, 2 * c:].astype(g_ref.dtype)


def project_tpg(v_p, w_all, b_all, c, tile):
    """v_p: (B, D, Np); w_all: (D, 3C) bf16; b_all: (1, 3C) f32."""
    B, D, n_pad = v_p.shape
    c3 = w_all.shape[1]
    vblk = lambda b, n: (b, 0, n)
    oblk = lambda b, n: (b, n, 0)
    full = lambda b, n: (0, 0)
    return pl.pallas_call(
        functools.partial(_proj_kernel, c=c),
        out_shape=tuple(jax.ShapeDtypeStruct((B, n_pad, c), jnp.bfloat16)
                        for _ in range(3)),
        grid_spec=pltpu.PrefetchScalarGridSpec(
            num_scalar_prefetch=0,
            grid=(B, n_pad // tile),
            in_specs=[
                pl.BlockSpec((1, D, tile), vblk),   # v block (native layout)
                pl.BlockSpec((D, c3), full),        # fused proj weight
                pl.BlockSpec((1, c3), full),        # fused proj bias
            ],
            out_specs=[
                pl.BlockSpec((1, tile, c), oblk),   # theta (already / N)
                pl.BlockSpec((1, tile, c), oblk),   # phi
                pl.BlockSpec((1, tile, c), oblk),   # g
            ],
        ),
        compiler_params=pltpu.CompilerParams(
            dimension_semantics=("parallel", "parallel"),
            vmem_limit_bytes=_VMEM_LIMIT_BYTES),
    )(v_p, w_all, b_all)


# ---------------------------------------------------------------------------
# Kernel 2: relation attention + output 1x1 conv (BN folded) + residual.
#   Grid = (batch, query tiles), both parallel.  Keys/values stay whole, so
#   the (already folded) 1/N normalization is exact.  Output is produced
#   directly in (B, D, N) layout (same blocks as the residual v).
# ---------------------------------------------------------------------------
def _attn_out_kernel(th_ref, ph_ref, g_ref, v_ref, wo_ref, shift_ref, out_ref):
    th = th_ref[0]                       # (TQ, C) bf16, already scaled by 1/N
    ph = ph_ref[0]                       # (Np, C) bf16
    gg = g_ref[0]                        # (Np, C) bf16
    # R/N = (theta/N) @ phi^T  -> (TQ, Np)
    r = jax.lax.dot_general(th, ph, (((1,), (1,)), ((), ())),
                            preferred_element_type=jnp.float32)
    # y = (R/N) @ g            -> (TQ, C)
    y = jnp.dot(r.astype(jnp.bfloat16), gg, preferred_element_type=jnp.float32)
    # z^T = (scale . w_out) @ y^T  -> (D, TQ): output directly in v's layout.
    zt = jax.lax.dot_general(wo_ref[...], y.astype(jnp.bfloat16),
                             (((1,), (1,)), ((), ())),
                             preferred_element_type=jnp.float32)
    out_ref[0] = (zt + shift_ref[...] + v_ref[0]).astype(out_ref.dtype)


def attention_out(th, ph, g, v_p, wo_fold, shift2, tile):
    """th/ph/g: (B, Np, C) bf16; v_p: (B, D, Np) f32; wo_fold: (D, C) bf16;
    shift2: (D, 1) f32  ->  (B, D, Np) f32."""
    B, n_pad, C = th.shape
    D = v_p.shape[1]
    qblk = lambda b, q: (b, q, 0)
    kblk = lambda b, q: (b, 0, 0)
    vblk = lambda b, q: (b, 0, q)
    full = lambda b, q: (0, 0)
    return pl.pallas_call(
        _attn_out_kernel,
        out_shape=jax.ShapeDtypeStruct((B, D, n_pad), jnp.float32),
        grid_spec=pltpu.PrefetchScalarGridSpec(
            num_scalar_prefetch=0,
            grid=(B, n_pad // tile),
            in_specs=[
                pl.BlockSpec((1, tile, C), qblk),    # theta (query tile)
                pl.BlockSpec((1, n_pad, C), kblk),   # phi   (all keys)
                pl.BlockSpec((1, n_pad, C), kblk),   # g     (all values)
                pl.BlockSpec((1, D, tile), vblk),    # residual v (native)
                pl.BlockSpec((D, C), full),          # W conv weight * BN scale
                pl.BlockSpec((D, 1), full),          # combined bias/shift
            ],
            out_specs=pl.BlockSpec((1, D, tile), vblk),
        ),
        compiler_params=pltpu.CompilerParams(
            dimension_semantics=("parallel", "parallel"),
            vmem_limit_bytes=_VMEM_LIMIT_BYTES),
    )(th, ph, g, v_p, wo_fold, shift2)


# ---------------------------------------------------------------------------
# Host wrapper (forward pass of Rs_GCN, eval mode)
# ---------------------------------------------------------------------------
@jax.jit
def rs_gcn_forward(params, v):
    B, D, N = v.shape
    C = params["w_theta"].shape[0]
    tile, n_pad = _pos_tile(N)

    # Fuse theta/phi/g weights into one (D, 3C) matrix; fold 1/N into theta.
    w_all = jnp.concatenate(
        [params["w_theta"].T * (1.0 / N), params["w_phi"].T, params["w_g"].T],
        axis=1).astype(jnp.bfloat16)                          # (D, 3C)
    b_all = jnp.concatenate(
        [params["b_theta"] * (1.0 / N), params["b_phi"], params["b_g"]]
    ).reshape(1, 3 * C).astype(jnp.float32)                   # (1, 3C)

    # BatchNorm1d (eval) folded into the output conv: scale into the weight
    # rows, bias/shift combined into a single per-channel shift.
    eps = 1e-5
    scale = params["bn_gamma"] * jax.lax.rsqrt(params["bn_var"] + eps)
    wo_fold = (params["w_out"] * scale[:, None]).astype(jnp.bfloat16)   # (D, C)
    shift2 = (params["bn_beta"]
              + scale * (params["b_out"] - params["bn_mean"])
              ).reshape(D, 1).astype(jnp.float32)                        # (D, 1)

    v_p = v if n_pad == N else jnp.pad(v, ((0, 0), (0, 0), (0, n_pad - N)))

    th, ph, g = project_tpg(v_p, w_all, b_all, C, tile)

    if n_pad != N:
        # Padded key positions would contribute their bias otherwise; zero
        # their value rows so they drop out of y = (R/N) @ g exactly.
        mask = (jnp.arange(n_pad) < N).astype(g.dtype)[None, :, None]
        g = g * mask

    out = attention_out(th, ph, g, v_p, wo_fold, shift2, tile)
    if n_pad != N:
        out = out[:, :, :N]
    return out                                                # (B, D, N)


# ---------------------------------------------------------------------------
# Pure-JAX reference (mirrors the PyTorch forward exactly, f32)
# ---------------------------------------------------------------------------
def rs_gcn_reference(params, v):
    def conv1(w, b, x):                          # w (Cout, Cin), x (B, Cin, N)
        return jnp.einsum("oc,bcn->bon", w, x) + b[None, :, None]

    g_v = conv1(params["w_g"], params["b_g"], v)             # (B, C, N)
    th = conv1(params["w_theta"], params["b_theta"], v)      # (B, C, N)
    ph = conv1(params["w_phi"], params["b_phi"], v)          # (B, C, N)
    g_v = jnp.transpose(g_v, (0, 2, 1))                      # (B, N, C)
    th = jnp.transpose(th, (0, 2, 1))                        # (B, N, C)
    R = jnp.matmul(th, ph)                                   # (B, N, N)
    R = R / R.shape[-1]
    y = jnp.matmul(R, g_v)                                   # (B, N, C)
    y = jnp.transpose(y, (0, 2, 1))                          # (B, C, N)
    wy = conv1(params["w_out"], params["b_out"], y)          # (B, D, N)
    scale = params["bn_gamma"] / jnp.sqrt(params["bn_var"] + 1e-5)
    shift = params["bn_beta"] - params["bn_mean"] * scale
    wy = wy * scale[None, :, None] + shift[None, :, None]
    return wy + v


if __name__ == "__main__":
    key = jax.random.PRNGKey(0)
    ks = jax.random.split(key, 13)

    B, D, N = 2, 16, 32          # batch, in_channels, positions
    C = D // 2                   # inter_channels = in_channels // 2 (module default)

    def u(k, shape, bound):
        return jax.random.uniform(k, shape, jnp.float32, -bound, bound)

    bw = 1.0 / (D ** 0.5)        # Conv1d(kernel=1) fan_in = in_channels
    bo = 1.0 / (C ** 0.5)
    params = {
        "w_g":     u(ks[0], (C, D), bw), "b_g":     u(ks[1], (C,), bw),
        "w_theta": u(ks[2], (C, D), bw), "b_theta": u(ks[3], (C,), bw),
        "w_phi":   u(ks[4], (C, D), bw), "b_phi":   u(ks[5], (C,), bw),
        "w_out":   u(ks[6], (D, C), bo), "b_out":   u(ks[7], (D,), bo),
        # The PyTorch module initializes BN weight/bias to 0 (so W_y == 0 at
        # init).  The forward formula is identical; nonzero BN params are used
        # here so the full attention/conv/BN path is exercised numerically.
        "bn_gamma": 1.0 + 0.1 * jax.random.normal(ks[8], (D,), jnp.float32),
        "bn_beta":  0.1 * jax.random.normal(ks[9], (D,), jnp.float32),
        "bn_mean":  0.1 * jax.random.normal(ks[10], (D,), jnp.float32),
        "bn_var":   jnp.abs(1.0 + 0.1 * jax.random.normal(ks[11], (D,), jnp.float32)),
    }

    v = jax.random.normal(ks[12], (B, D, N), jnp.float32)

    out = rs_gcn_forward(params, v)
    jax.block_until_ready(out)

    ref = rs_gcn_reference(params, v)
    assert out.shape == (B, D, N)
    # bf16 MXU inputs -> looser tolerance than pure-f32 (review note).
    err = float(jnp.max(jnp.abs(out - ref)))
    assert jnp.allclose(out, ref, atol=3e-2, rtol=3e-2), err

    print("KERNEL_OK")
</pallas_src>

<mosaic_0001>
module attributes {stable_mosaic.version = 11 : i64} {
  func.func @_attn_out_kernel(%arg0: i32, %arg1: i32, %arg2: memref<1x32x8xbf16, #tpu.memory_space<vmem>>, %arg3: memref<1x32x8xbf16, #tpu.memory_space<vmem>>, %arg4: memref<1x32x8xbf16, #tpu.memory_space<vmem>>, %arg5: memref<1x16x32xf32, #tpu.memory_space<vmem>>, %arg6: memref<16x8xbf16, #tpu.memory_space<vmem>>, %arg7: memref<16x1xf32, #tpu.memory_space<vmem>>, %arg8: memref<1x16x32xf32, #tpu.memory_space<vmem>>) attributes {dimension_semantics = [#tpu.dimension_semantics<parallel>, #tpu.dimension_semantics<parallel>], iteration_bounds = array<i64: 2, 1>, scalar_prefetch = 0 : i64, scratch_operands = 0 : i64, tpu.core_type = #tpu.core_type<tc>, window_params = [{transform_indices = @transform_0, window_bounds = array<i64: 1, 32, 8>}, {transform_indices = @transform_1, window_bounds = array<i64: 1, 32, 8>}, {transform_indices = @transform_2, window_bounds = array<i64: 1, 32, 8>}, {transform_indices = @transform_3, window_bounds = array<i64: 1, 16, 32>}, {pipeline_mode = #tpu.pipeline_mode<synchronous>, transform_indices = @transform_4, window_bounds = array<i64: 16, 8>}, {pipeline_mode = #tpu.pipeline_mode<synchronous>, transform_indices = @transform_5, window_bounds = array<i64: 16, 1>}, {transform_indices = @transform_6, window_bounds = array<i64: 1, 16, 32>}]} {
    %c0 = arith.constant 0 : index
    %c0_0 = arith.constant 0 : index
    %c0_1 = arith.constant 0 : index
    %0 = vector.load %arg2[%c0, %c0_0, %c0_1] : memref<1x32x8xbf16, #tpu.memory_space<vmem>>, vector<1x32x8xbf16>
    %1 = vector.shape_cast %0 : vector<1x32x8xbf16> to vector<32x8xbf16>
    %c0_2 = arith.constant 0 : index
    %c0_3 = arith.constant 0 : index
    %c0_4 = arith.constant 0 : index
    %2 = vector.load %arg3[%c0_2, %c0_3, %c0_4] : memref<1x32x8xbf16, #tpu.memory_space<vmem>>, vector<1x32x8xbf16>
    %3 = vector.shape_cast %2 : vector<1x32x8xbf16> to vector<32x8xbf16>
    %c0_5 = arith.constant 0 : index
    %c0_6 = arith.constant 0 : index
    %c0_7 = arith.constant 0 : index
    %4 = vector.load %arg4[%c0_5, %c0_6, %c0_7] : memref<1x32x8xbf16, #tpu.memory_space<vmem>>, vector<1x32x8xbf16>
    %5 = vector.shape_cast %4 : vector<1x32x8xbf16> to vector<32x8xbf16>
    %cst = arith.constant dense<0.000000e+00> : vector<32x32xf32>
    %6 = tpu.matmul %1, %3, %cst {dimension_numbers = #tpu.dot_dimension_numbers<[1], [1], [0], [0], [0, 0, 1, 0], [], []>} : vector<32x8xbf16>, vector<32x8xbf16>, vector<32x32xf32> -> vector<32x32xf32>
    %7 = arith.truncf %6 : vector<32x32xf32> to vector<32x32xbf16>
    %cst_8 = arith.constant dense<0.000000e+00> : vector<32x8xf32>
    %8 = tpu.matmul %7, %5, %cst_8 {dimension_numbers = #tpu.dot_dimension_numbers<[1], [0], [0], [1], [0, 0, 1, 1], [], []>} : vector<32x32xbf16>, vector<32x8xbf16>, vector<32x8xf32> -> vector<32x8xf32>
    %c0_9 = arith.constant 0 : index
    %c0_10 = arith.constant 0 : index
    %9 = vector.load %arg6[%c0_9, %c0_10] : memref<16x8xbf16, #tpu.memory_space<vmem>>, vector<16x8xbf16>
    %10 = arith.truncf %8 : vector<32x8xf32> to vector<32x8xbf16>
    %cst_11 = arith.constant dense<0.000000e+00> : vector<16x32xf32>
    %11 = tpu.matmul %9, %10, %cst_11 {dimension_numbers = #tpu.dot_dimension_numbers<[1], [1], [0], [0], [0, 0, 1, 0], [], []>} : vector<16x8xbf16>, vector<32x8xbf16>, vector<16x32xf32> -> vector<16x32xf32>
    %c0_12 = arith.constant 0 : index
    %c0_13 = arith.constant 0 : index
    %12 = vector.load %arg7[%c0_12, %c0_13] : memref<16x1xf32, #tpu.memory_space<vmem>>, vector<16x1xf32>
    %13 = vector.broadcast %12 : vector<16x1xf32> to vector<16x32xf32>
    %14 = arith.addf %11, %13 : vector<16x32xf32>
    %c0_14 = arith.constant 0 : index
    %c0_15 = arith.constant 0 : index
    %c0_16 = arith.constant 0 : index
    %15 = vector.load %arg5[%c0_14, %c0_15, %c0_16] : memref<1x16x32xf32, #tpu.memory_space<vmem>>, vector<1x16x32xf32>
    %16 = vector.shape_cast %15 : vector<1x16x32xf32> to vector<16x32xf32>
    %17 = arith.addf %14, %16 : vector<16x32xf32>
    %c0_17 = arith.constant 0 : index
    %c0_18 = arith.constant 0 : index
    %c0_19 = arith.constant 0 : index
    %18 = vector.load %arg8[%c0_17, %c0_18, %c0_19] : memref<1x16x32xf32, #tpu.memory_space<vmem>>, vector<1x16x32xf32>
    %19 = vector.shape_cast %18 : vector<1x16x32xf32> to vector<16x32xf32>
    %20 = vector.shape_cast %17 : vector<16x32xf32> to vector<1x16x32xf32>
    tpu.vector_store %arg8[%c0_17, %c0_18, %c0_19], %20 {strides = array<i32>} : memref<1x16x32xf32, #tpu.memory_space<vmem>>, vector<1x16x32xf32>,
    return
  }
  func.func @transform_0(%arg0: i32, %arg1: i32) -> (i32, i32, i32) {
    %c0_i32 = arith.constant 0 : i32
    %c0_i32_0 = arith.constant 0 : i32
    return %arg0, %arg1, %c0_i32 : i32, i32, i32
  }
  func.func @transform_1(%arg0: i32, %arg1: i32) -> (i32, i32, i32) {
    %c0_i32 = arith.constant 0 : i32
    %c0_i32_0 = arith.constant 0 : i32
    %c0_i32_1 = arith.constant 0 : i32
    return %arg0, %c0_i32, %c0_i32_0 : i32, i32, i32
  }
  func.func @transform_2(%arg0: i32, %arg1: i32) -> (i32, i32, i32) {
    %c0_i32 = arith.constant 0 : i32
    %c0_i32_0 = arith.constant 0 : i32
    %c0_i32_1 = arith.constant 0 : i32
    return %arg0, %c0_i32, %c0_i32_0 : i32, i32, i32
  }
  func.func @transform_3(%arg0: i32, %arg1: i32) -> (i32, i32, i32) {
    %c0_i32 = arith.constant 0 : i32
    %c0_i32_0 = arith.constant 0 : i32
    return %arg0, %c0_i32, %arg1 : i32, i32, i32
  }
  func.func @transform_4(%arg0: i32, %arg1: i32) -> (i32, i32) {
    %c0_i32 = arith.constant 0 : i32
    %c0_i32_0 = arith.constant 0 : i32
    %c0_i32_1 = arith.constant 0 : i32
    return %c0_i32, %c0_i32_0 : i32, i32
  }
  func.func @transform_5(%arg0: i32, %arg1: i32) -> (i32, i32) {
    %c0_i32 = arith.constant 0 : i32
    %c0_i32_0 = arith.constant 0 : i32
    %c0_i32_1 = arith.constant 0 : i32
    return %c0_i32, %c0_i32_0 : i32, i32
  }
  func.func @transform_6(%arg0: i32, %arg1: i32) -> (i32, i32, i32) {
    %c0_i32 = arith.constant 0 : i32
    %c0_i32_0 = arith.constant 0 : i32
    return %arg0, %c0_i32, %arg1 : i32, i32, i32
  }
}

module attributes {stable_mosaic.version = 11 : i64} {
  func.func @_proj_kernel(%arg0: i32, %arg1: i32, %arg2: memref<1x16x32xf32, #tpu.memory_space<vmem>>, %arg3: memref<16x24xbf16, #tpu.memory_space<vmem>>, %arg4: memref<1x24xf32, #tpu.memory_space<vmem>>, %arg5: memref<1x32x8xbf16, #tpu.memory_space<vmem>>, %arg6: memref<1x32x8xbf16, #tpu.memory_space<vmem>>, %arg7: memref<1x32x8xbf16, #tpu.memory_space<vmem>>) attributes {dimension_semantics = [#tpu.dimension_semantics<parallel>, #tpu.dimension_semantics<parallel>], iteration_bounds = array<i64: 2, 1>, scalar_prefetch = 0 : i64, scratch_operands = 0 : i64, tpu.core_type = #tpu.core_type<tc>, window_params = [{transform_indices = @transform_0, window_bounds = array<i64: 1, 16, 32>}, {pipeline_mode = #tpu.pipeline_mode<synchronous>, transform_indices = @transform_1, window_bounds = array<i64: 16, 24>}, {pipeline_mode = #tpu.pipeline_mode<synchronous>, transform_indices = @transform_2, window_bounds = array<i64: 1, 24>}, {transform_indices = @transform_3, window_bounds = array<i64: 1, 32, 8>}, {transform_indices = @transform_4, window_bounds = array<i64: 1, 32, 8>}, {transform_indices = @transform_5, window_bounds = array<i64: 1, 32, 8>}]} {
    %c0 = arith.constant 0 : index
    %c0_0 = arith.constant 0 : index
    %c0_1 = arith.constant 0 : index
    %0 = vector.load %arg2[%c0, %c0_0, %c0_1] : memref<1x16x32xf32, #tpu.memory_space<vmem>>, vector<1x16x32xf32>
    %1 = vector.shape_cast %0 : vector<1x16x32xf32> to vector<16x32xf32>
    %2 = arith.truncf %1 : vector<16x32xf32> to vector<16x32xbf16>
    %c0_2 = arith.constant 0 : index
    %c0_3 = arith.constant 0 : index
    %3 = vector.load %arg3[%c0_2, %c0_3] : memref<16x24xbf16, #tpu.memory_space<vmem>>, vector<16x24xbf16>
    %cst = arith.constant dense<0.000000e+00> : vector<32x24xf32>
    %4 = tpu.matmul %2, %3, %cst {dimension_numbers = #tpu.dot_dimension_numbers<[0], [0], [1], [1], [0, 1, 1, 1], [], []>} : vector<16x32xbf16>, vector<16x24xbf16>, vector<32x24xf32> -> vector<32x24xf32>
    %c0_4 = arith.constant 0 : index
    %c0_5 = arith.constant 0 : index
    %5 = vector.load %arg4[%c0_4, %c0_5] : memref<1x24xf32, #tpu.memory_space<vmem>>, vector<1x24xf32>
    %6 = vector.broadcast %5 : vector<1x24xf32> to vector<32x24xf32>
    %7 = arith.addf %4, %6 : vector<32x24xf32>
    %8 = vector.extract_strided_slice %7 {offsets = [0, 0], sizes = [32, 8], strides = [1, 1]} : vector<32x24xf32> to vector<32x8xf32>
    %9 = arith.truncf %8 : vector<32x8xf32> to vector<32x8xbf16>
    %c0_6 = arith.constant 0 : index
    %c0_7 = arith.constant 0 : index
    %c0_8 = arith.constant 0 : index
    %10 = vector.load %arg5[%c0_6, %c0_7, %c0_8] : memref<1x32x8xbf16, #tpu.memory_space<vmem>>, vector<1x32x8xbf16>
    %11 = vector.shape_cast %10 : vector<1x32x8xbf16> to vector<32x8xbf16>
    %12 = vector.shape_cast %9 : vector<32x8xbf16> to vector<1x32x8xbf16>
    tpu.vector_store %arg5[%c0_6, %c0_7, %c0_8], %12 {strides = array<i32>} : memref<1x32x8xbf16, #tpu.memory_space<vmem>>, vector<1x32x8xbf16>,
    %13 = vector.extract_strided_slice %7 {offsets = [0, 8], sizes = [32, 8], strides = [1, 1]} : vector<32x24xf32> to vector<32x8xf32>
    %14 = arith.truncf %13 : vector<32x8xf32> to vector<32x8xbf16>
    %c0_9 = arith.constant 0 : index
    %c0_10 = arith.constant 0 : index
    %c0_11 = arith.constant 0 : index
    %15 = vector.load %arg6[%c0_9, %c0_10, %c0_11] : memref<1x32x8xbf16, #tpu.memory_space<vmem>>, vector<1x32x8xbf16>
    %16 = vector.shape_cast %15 : vector<1x32x8xbf16> to vector<32x8xbf16>
    %17 = vector.shape_cast %14 : vector<32x8xbf16> to vector<1x32x8xbf16>
    tpu.vector_store %arg6[%c0_9, %c0_10, %c0_11], %17 {strides = array<i32>} : memref<1x32x8xbf16, #tpu.memory_space<vmem>>, vector<1x32x8xbf16>,
    %18 = vector.extract_strided_slice %7 {offsets = [0, 16], sizes = [32, 8], strides = [1, 1]} : vector<32x24xf32> to vector<32x8xf32>
    %19 = arith.truncf %18 : vector<32x8xf32> to vector<32x8xbf16>
    %c0_12 = arith.constant 0 : index
    %c0_13 = arith.constant 0 : index
    %c0_14 = arith.constant 0 : index
    %20 = vector.load %arg7[%c0_12, %c0_13, %c0_14] : memref<1x32x8xbf16, #tpu.memory_space<vmem>>, vector<1x32x8xbf16>
    %21 = vector.shape_cast %20 : vector<1x32x8xbf16> to vector<32x8xbf16>
    %22 = vector.shape_cast %19 : vector<32x8xbf16> to vector<1x32x8xbf16>
    tpu.vector_store %arg7[%c0_12, %c0_13, %c0_14], %22 {strides = array<i32>} : memref<1x32x8xbf16, #tpu.memory_space<vmem>>, vector<1x32x8xbf16>,
    return
  }
  func.func @transform_0(%arg0: i32, %arg1: i32) -> (i32, i32, i32) {
    %c0_i32 = arith.constant 0 : i32
    %c0_i32_0 = arith.constant 0 : i32
    return %arg0, %c0_i32, %arg1 : i32, i32, i32
  }
  func.func @transform_1(%arg0: i32, %arg1: i32) -> (i32, i32) {
    %c0_i32 = arith.constant 0 : i32
    %c0_i32_0 = arith.constant 0 : i32
    %c0_i32_1 = arith.constant 0 : i32
    return %c0_i32, %c0_i32_0 : i32, i32
  }
  func.func @transform_2(%arg0: i32, %arg1: i32) -> (i32, i32) {
    %c0_i32 = arith.constant 0 : i32
    %c0_i32_0 = arith.constant 0 : i32
    %c0_i32_1 = arith.constant 0 : i32
    return %c0_i32, %c0_i32_0 : i32, i32
  }
  func.func @transform_3(%arg0: i32, %arg1: i32) -> (i32, i32, i32) {
    %c0_i32 = arith.constant 0 : i32
    %c0_i32_0 = arith.constant 0 : i32
    return %arg0, %arg1, %c0_i32 : i32, i32, i32
  }
  func.func @transform_4(%arg0: i32, %arg1: i32) -> (i32, i32, i32) {
    %c0_i32 = arith.constant 0 : i32
    %c0_i32_0 = arith.constant 0 : i32
    return %arg0, %arg1, %c0_i32 : i32, i32, i32
  }
  func.func @transform_5(%arg0: i32, %arg1: i32) -> (i32, i32, i32) {
    %c0_i32 = arith.constant 0 : i32
    %c0_i32_0 = arith.constant 0 : i32
    return %arg0, %arg1, %c0_i32 : i32, i32, i32
  }
}

</mosaic_0001>

<llo_original>
// kernel: rs_gcn_forward.3
$region0: #{rs_gcn_forward.3}
  #allocation0 [shape = 'u32[]', space=smem, size = 0x4, offset = 0x4, fixed_abs, tag = 'smem constant byte address 0x4 - core index']
  #allocation1 [shape = 'u32[144,128]{1,0:T(1,128)}', space=vmem, size = 0x12000, scoped, tag = 'internal scratch']
  %s0 = inlined_call_operand.vmem [shape: bf16[2,32,8], index: 0, kind: input, shape index: {}]
  %s1 = inlined_call_operand.vmem [shape: bf16[2,32,8], index: 1, kind: input, shape index: {}]
  %s2 = inlined_call_operand.vmem [shape: bf16[2,32,8], index: 2, kind: input, shape index: {}]
  %s3 = inlined_call_operand.vmem [shape: f32[2,16,32], index: 3, kind: input, shape index: {}]
  %s4 = inlined_call_operand.vmem [shape: bf16[16,8], index: 4, kind: input, shape index: {}]
  %s5 = inlined_call_operand.vmem [shape: f32[16,1], index: 5, kind: input, shape index: {}]
  %s6 = inlined_call_operand.hbm [shape: f32[2,16,32], index: 6, kind: output, shape index: {}]
  %s7 = sld [smem:[#allocation0]]
  $region57: #{rs_gcn_forward.3} parent=0
    _
  %s9 = ssub.s32 1, %s7
  %s10 = scalar_select 0, %s9, %s7
  $region1: #{rs_gcn_forward.3} parent=0
    #allocation2 [shape = 'u8[16384]{0}', space=vmem, size = 0x4000, scoped, tag = 'output window, operand 0']
    #allocation3 [shape = 's32[2]{0}', space=sflag, size = 0x8, scoped, tag = 'scoped memory for rs_gcn_forward.3']
    %11 = vsyncpa [#allocation3], 0
    %s12 = scalar_lea.sflag [#allocation3], 1
    %13 = vsyncpa %s12, 0
    loop: start=0, step=1, limit=4
    $region2: #{rs_gcn_forward.3} parent=1 // loop_pre_header
      _
    $region3: #{rs_gcn_forward.3} parent=1 // loop_header
      %s15 = sphi 0, %s19
      %p16 = scmp.ge.s32.totalorder %s15, 4
      %s22 = sphi 0, %s34
      %s23 = sphi 0, %s30
      %s24 = sphi 0, %s22
      %s25 = sphi 0, %s23
      %s26 = sphi 0, %s24
      %s27 = sphi 0, %s25
      %s39 = sphi 0, %s41
      %s42 = sphi 0, %s39
      %s43 = sphi 0, %s42
      %s59 = sphi 0, %s43
      %s65 = sphi 0, %s67
      %s68 = sphi 0, %s65
      %s69 = sphi 0, %s68
      %s85 = sphi 0, %s69
      %s91 = sphi 0, %s93
      %s94 = sphi 0, %s91
      %s95 = sphi 0, %s94
      %s111 = sphi 0, %s95
      %s119 = sphi 0, %s121
      %s122 = sphi 0, %s119
      %s123 = sphi 0, %s122
      %s139 = sphi 0, %s123
      %s143 = sphi 0, %s143
      %s145 = sphi 0, %s143
      %s146 = sphi 0, %s145
      %s160 = sphi 0, %s146
      %s164 = sphi 0, %s164
      %s166 = sphi 0, %s164
      %s167 = sphi 0, %s166
      %s181 = sphi 0, %s167
      %s189 = sphi 0, %s191
      %s192 = sphi 0, %s189
      %s193 = sphi 0, %s192
      %s209 = sphi 0, %s193
    $region4: #{rs_gcn_forward.3} parent=1 // loop_header_branch
      %18 = sbr.rel (%p16) target = $region8
    $region5: #{rs_gcn_forward.3} parent=1 // loop_body
      %s20 = ssub.s32 %s15, 1
      %s21 = ssub.s32 %s15, 2
      %s28 = sadd.s32 1, %s23
      %p29 = scmp.ge.s32.totalorder %s28, 1
      %s30 = scalar_select %p29, 0, %s28
      %s31 = sadd.s32 1, %s22
      %s32 = scalar_select %p29, %s31, %s22
      %p33 = scmp.ge.s32.totalorder %s32, 2
      %s34 = scalar_select %p33, 0, %s32
      %s35 = ssub.s32 %s22, %s34
      %s36 = ssub.s32 %s23, %s30
      %s37 = sor.u32 %s35, %s36
      %p38 = scmp.eq.s32.totalorder %s37, 0
      %s40 = sadd.s32 %s39, 1
      %s41 = scalar_select %p38, %s39, %s40
      %p44 = pneg %p38
      %p45 = scmp.eq.s32.totalorder %s15, 1
      %p46 = por %p44, %p45
      %p47 = scmp.ne.s32.totalorder %s39, %s42
      %p48 = scmp.eq.s32.totalorder %s15, 0
      %p49 = por %p47, %p48
      %p50 = scmp.ne.s32.totalorder %s39, %s42
      %p51 = scmp.eq.s32.totalorder %s20, 1
      %p52 = por %p50, %p51
      %p53 = scmp.ne.s32.totalorder %s42, %s43
      %p54 = scmp.eq.s32.totalorder %s20, 0
      %p55 = por %p53, %p54
      %p56 = scmp.ne.s32.totalorder %s42, %s43
      %p57 = scmp.eq.s32.totalorder %s21, 1
      %p58 = por %p56, %p57
      %p60 = scmp.ne.s32.totalorder %s43, %s59
      %p61 = scmp.eq.s32.totalorder %s21, 0
      %p62 = por %p60, %p61
      %s63 = ssub.s32 %s22, %s34
      %p64 = scmp.eq.s32.totalorder %s63, 0
      %s66 = sadd.s32 %s65, 1
      %s67 = scalar_select %p64, %s65, %s66
      %p70 = pneg %p64
      %p71 = scmp.eq.s32.totalorder %s15, 1
      %p72 = por %p70, %p71
      %p73 = scmp.ne.s32.totalorder %s65, %s68
      %p74 = scmp.eq.s32.totalorder %s15, 0
      %p75 = por %p73, %p74
      %p76 = scmp.ne.s32.totalorder %s65, %s68
      %p77 = scmp.eq.s32.totalorder %s20, 1
      %p78 = por %p76, %p77
      %p79 = scmp.ne.s32.totalorder %s68, %s69
      %p80 = scmp.eq.s32.totalorder %s20, 0
      %p81 = por %p79, %p80
      %p82 = scmp.ne.s32.totalorder %s68, %s69
      %p83 = scmp.eq.s32.totalorder %s21, 1
      %p84 = por %p82, %p83
      %p86 = scmp.ne.s32.totalorder %s69, %s85
      %p87 = scmp.eq.s32.totalorder %s21, 0
      %p88 = por %p86, %p87
      %s89 = ssub.s32 %s22, %s34
      %p90 = scmp.eq.s32.totalorder %s89, 0
      %s92 = sadd.s32 %s91, 1
      %s93 = scalar_select %p90, %s91, %s92
      %p96 = pneg %p90
      %p97 = scmp.eq.s32.totalorder %s15, 1
      %p98 = por %p96, %p97
      %p99 = scmp.ne.s32.totalorder %s91, %s94
      %p100 = scmp.eq.s32.totalorder %s15, 0
      %p101 = por %p99, %p100
      %p102 = scmp.ne.s32.totalorder %s91, %s94
      %p103 = scmp.eq.s32.totalorder %s20, 1
      %p104 = por %p102, %p103
      %p105 = scmp.ne.s32.totalorder %s94, %s95
      %p106 = scmp.eq.s32.totalorder %s20, 0
      %p107 = por %p105, %p106
      %p108 = scmp.ne.s32.totalorder %s94, %s95
      %p109 = scmp.eq.s32.totalorder %s21, 1
      %p110 = por %p108, %p109
      %p112 = scmp.ne.s32.totalorder %s95, %s111
      %p113 = scmp.eq.s32.totalorder %s21, 0
      %p114 = por %p112, %p113
      %s115 = ssub.s32 %s22, %s34
      %s116 = ssub.s32 %s23, %s30
      %s117 = sor.u32 %s115, %s116
      %p118 = scmp.eq.s32.totalorder %s117, 0
      %s120 = sadd.s32 %s119, 1
      %s121 = scalar_select %p118, %s119, %s120
      %p124 = pneg %p118
      %p125 = scmp.eq.s32.totalorder %s15, 1
      %p126 = por %p124, %p125
      %p127 = scmp.ne.s32.totalorder %s119, %s122
      %p128 = scmp.eq.s32.totalorder %s15, 0
      %p129 = por %p127, %p128
      %p130 = scmp.ne.s32.totalorder %s119, %s122
      %p131 = scmp.eq.s32.totalorder %s20, 1
      %p132 = por %p130, %p131
      %p133 = scmp.ne.s32.totalorder %s122, %s123
      %p134 = scmp.eq.s32.totalorder %s20, 0
      %p135 = por %p133, %p134
      %p136 = scmp.ne.s32.totalorder %s122, %s123
      %p137 = scmp.eq.s32.totalorder %s21, 1
      %p138 = por %p136, %p137
      %p140 = scmp.ne.s32.totalorder %s123, %s139
      %p141 = scmp.eq.s32.totalorder %s21, 0
      %p142 = por %p140, %p141
      %s144 = sadd.s32 %s143, 1
      %p147 = scmp.eq.s32.totalorder %s15, 1
      %p148 = scmp.ne.s32.totalorder %s143, %s145
      %p149 = scmp.eq.s32.totalorder %s15, 0
      %p150 = por %p148, %p149
      %p151 = scmp.ne.s32.totalorder %s143, %s145
      %p152 = scmp.eq.s32.totalorder %s20, 1
      %p153 = por %p151, %p152
      %p154 = scmp.ne.s32.totalorder %s145, %s146
      %p155 = scmp.eq.s32.totalorder %s20, 0
      %p156 = por %p154, %p155
      %p157 = scmp.ne.s32.totalorder %s145, %s146
      %p158 = scmp.eq.s32.totalorder %s21, 1
      %p159 = por %p157, %p158
      %p161 = scmp.ne.s32.totalorder %s146, %s160
      %p162 = scmp.eq.s32.totalorder %s21, 0
      %p163 = por %p161, %p162
      %s165 = sadd.s32 %s164, 1
      %p168 = scmp.eq.s32.totalorder %s15, 1
      %p169 = scmp.ne.s32.totalorder %s164, %s166
      %p170 = scmp.eq.s32.totalorder %s15, 0
      %p171 = por %p169, %p170
      %p172 = scmp.ne.s32.totalorder %s164, %s166
      %p173 = scmp.eq.s32.totalorder %s20, 1
      %p174 = por %p172, %p173
      %p175 = scmp.ne.s32.totalorder %s166, %s167
      %p176 = scmp.eq.s32.totalorder %s20, 0
      %p177 = por %p175, %p176
      %p178 = scmp.ne.s32.totalorder %s166, %s167
      %p179 = scmp.eq.s32.totalorder %s21, 1
      %p180 = por %p178, %p179
      %p182 = scmp.ne.s32.totalorder %s167, %s181
      %p183 = scmp.eq.s32.totalorder %s21, 0
      %p184 = por %p182, %p183
      %s185 = ssub.s32 %s22, %s34
      %s186 = ssub.s32 %s23, %s30
      %s187 = sor.u32 %s185, %s186
      %p188 = scmp.eq.s32.totalorder %s187, 0
      %s190 = sadd.s32 %s189, 1
      %s191 = scalar_select %p188, %s189, %s190
      %p194 = pneg %p188
      %p195 = scmp.eq.s32.totalorder %s15, 1
      %p196 = por %p194, %p195
      %p197 = scmp.ne.s32.totalorder %s189, %s192
      %p198 = scmp.eq.s32.totalorder %s15, 0
      %p199 = por %p197, %p198
      %p200 = scmp.ne.s32.totalorder %s189, %s192
      %p201 = scmp.eq.s32.totalorder %s20, 1
      %p202 = por %p200, %p201
      %p203 = scmp.ne.s32.totalorder %s192, %s193
      %p204 = scmp.eq.s32.totalorder %s20, 0
      %p205 = por %p203, %p204
      %p206 = scmp.ne.s32.totalorder %s192, %s193
      %p207 = scmp.eq.s32.totalorder %s21, 1
      %p208 = por %p206, %p207
      %p210 = scmp.ne.s32.totalorder %s193, %s209
      %p211 = scmp.eq.s32.totalorder %s21, 0
      %p212 = por %p210, %p211
      %p213 = scmp.le.s32.totalorder 1, %s15
      %p214 = scmp.lt.s32.totalorder %s15, 3
      %p215 = pnand %p213, %p214
      %p216 = pneg %p215
      // Predicated region
      $region9: #{rs_gcn_forward.3} parent=5 // pred_check
        _
      $region10: #{rs_gcn_forward.3} parent=5 // pred_check_branch
        %218 = sbr.rel (%p215) target = $region12
      $region11: #{rs_gcn_forward.3} parent=5 // pred_region
        %s219 = ssub.s32 %s15, 1
        // Predicated region
        $region13: #{rs_gcn_forward.3} parent=11 // pred_check
          %p220 = pneg %p156
        $region14: #{rs_gcn_forward.3} parent=11 // pred_check_branch
          %222 = sbr.rel (%p220) target = $region16
        $region15: #{rs_gcn_forward.3} parent=11 // pred_region
          _
        $region16: #{rs_gcn_forward.3} parent=11 // pred_fallthru
          _
        // Predicated region
        $region17: #{rs_gcn_forward.3} parent=11 // pred_check
          %p223 = pneg %p177
        $region18: #{rs_gcn_forward.3} parent=11 // pred_check_branch
          %225 = sbr.rel (%p223) target = $region20
        $region19: #{rs_gcn_forward.3} parent=11 // pred_region
          _
        $region20: #{rs_gcn_forward.3} parent=11 // pred_fallthru
          _
      $region12: #{rs_gcn_forward.3} parent=5 // pred_fallthru
        _
      %p226 = scmp.lt.s32.totalorder %s15, 2
      // Predicated region
      $region21: #{rs_gcn_forward.3} parent=5 // pred_check
        %p227 = pneg %p226
      $region22: #{rs_gcn_forward.3} parent=5 // pred_check_branch
        %229 = sbr.rel (%p227) target = $region24
      $region23: #{rs_gcn_forward.3} parent=5 // pred_region
        // Predicated region
        $region25: #{rs_gcn_forward.3} parent=23 // pred_check
          %p230 = pneg %p49
        $region26: #{rs_gcn_forward.3} parent=23 // pred_check_branch
          %232 = sbr.rel (%p230) target = $region28
        $region27: #{rs_gcn_forward.3} parent=23 // pred_region
          %s233 = smul.u32 4, %s23
          %p234 = scmp.lt.s32.totalorder %s22, 1
          %s235 = scalar_select %p234, %s22, 1
          %p236 = scmp.lt.s32.totalorder %s233, 3
          %s237 = scalar_select %p236, %s233, 3
          %s238 = smul.addr %s235, 4
          %s239 = sadd.s32 %s237, %s238
          %s240 = smul.addr %s239, 4
          %s241 = scalar_lea.vmem %s0, %s240
          %s242 = smul.u32 4, %s23
        $region28: #{rs_gcn_forward.3} parent=23 // pred_fallthru
          _
        // Predicated region
        $region29: #{rs_gcn_forward.3} parent=23 // pred_check
          %p243 = pneg %p75
        $region30: #{rs_gcn_forward.3} parent=23 // pred_check_branch
          %245 = sbr.rel (%p243) target = $region32
        $region31: #{rs_gcn_forward.3} parent=23 // pred_region
          %p246 = scmp.lt.s32.totalorder %s22, 1
          %s247 = scalar_select %p246, %s22, 1
          %s248 = smul.addr %s247, 4
          %s249 = smul.addr %s248, 4
          %s250 = scalar_lea.vmem %s1, %s249
        $region32: #{rs_gcn_forward.3} parent=23 // pred_fallthru
          _
        // Predicated region
        $region33: #{rs_gcn_forward.3} parent=23 // pred_check
          %p251 = pneg %p101
        $region34: #{rs_gcn_forward.3} parent=23 // pred_check_branch
          %253 = sbr.rel (%p251) target = $region36
        $region35: #{rs_gcn_forward.3} parent=23 // pred_region
          %p254 = scmp.lt.s32.totalorder %s22, 1
          %s255 = scalar_select %p254, %s22, 1
          %s256 = smul.addr %s255, 4
          %s257 = smul.addr %s256, 4
          %s258 = scalar_lea.vmem %s2, %s257
        $region36: #{rs_gcn_forward.3} parent=23 // pred_fallthru
          _
        // Predicated region
        $region37: #{rs_gcn_forward.3} parent=23 // pred_check
          %p259 = pneg %p129
        $region38: #{rs_gcn_forward.3} parent=23 // pred_check_branch
          %261 = sbr.rel (%p259) target = $region40
        $region39: #{rs_gcn_forward.3} parent=23 // pred_region
          %p262 = scmp.lt.s32.totalorder %s22, 1
          %s263 = scalar_select %p262, %s22, 1
          %p264 = scmp.lt.s32.totalorder %s23, 0
          %s265 = scalar_select %p264, %s23, 0
          %s266 = smul.addr %s263, 2
          %s267 = sadd.s32 %s265, %s266
          %s268 = smul.addr %s267, 8
          %s269 = scalar_lea.vmem %s3, %s268
        $region40: #{rs_gcn_forward.3} parent=23 // pred_fallthru
          _
      $region24: #{rs_gcn_forward.3} parent=5 // pred_fallthru
        _
      %p270 = scmp.le.s32.totalorder 1, %s15
      %p271 = scmp.lt.s32.totalorder %s15, 3
      %p272 = pnand %p270, %p271
      %p273 = pneg %p272
      // Predicated region
      $region41: #{rs_gcn_forward.3} parent=5 // pred_check
        _
      $region42: #{rs_gcn_forward.3} parent=5 // pred_check_branch
        %275 = sbr.rel (%p272) target = $region44
      $region43: #{rs_gcn_forward.3} parent=5 // pred_region
        %s276 = ssub.s32 %s15, 1
        %s277 = smul.u32 4, %s25
        %p278 = scmp.lt.s32.totalorder %s24, 1
        %s279 = scalar_select %p278, %s24, 1
        %p280 = scmp.lt.s32.totalorder %s277, 3
        %s281 = scalar_select %p280, %s277, 3
        %s282 = smul.addr %s279, 4
        %s283 = sadd.s32 %s281, %s282
        %s284 = smul.addr %s283, 4
        %s285 = scalar_lea.vmem %s0, %s284
        %p286 = pneg %p55
        %p287 = pneg %p52
        %p288 = scmp.lt.s32.totalorder %s24, 1
        %s289 = scalar_select %p288, %s24, 1
        %s290 = smul.addr %s289, 4
        %s291 = smul.addr %s290, 4
        %s292 = scalar_lea.vmem %s1, %s291
        %p293 = pneg %p81
        %p294 = pneg %p78
        %p295 = scmp.lt.s32.totalorder %s24, 1
        %s296 = scalar_select %p295, %s24, 1
        %s297 = smul.addr %s296, 4
        %s298 = smul.addr %s297, 4
        %s299 = scalar_lea.vmem %s2, %s298
        %p300 = pneg %p107
        %p301 = pneg %p104
        %p302 = scmp.lt.s32.totalorder %s24, 1
        %s303 = scalar_select %p302, %s24, 1
        %p304 = scmp.lt.s32.totalorder %s25, 0
        %s305 = scalar_select %p304, %s25, 0
        %s306 = smul.addr %s303, 2
        %s307 = sadd.s32 %s305, %s306
        %s308 = smul.addr %s307, 8
        %s309 = scalar_lea.vmem %s3, %s308
        %p310 = pneg %p135
        %p311 = pneg %p132
        %p312 = pneg %p156
        %p313 = pneg %p153
        %p314 = pneg %p177
        %p315 = pneg %p174
        %p316 = pneg %p205
        %p317 = pneg %p202
        %s318 = sand.u32 %s192, 1
        %s319 = scalar_lea.sflag [#allocation3], %s318
        %s320 = sand.u32 %s192, 1
        %s321 = smul.addr %s320, 16
        %s322 = scalar_lea.vmem [#allocation2], %s321
        %s323 = smul.u32 4, %s25
        %p324 = scmp.lt.s32.totalorder %s24, 1
        %s325 = scalar_select %p324, %s24, 1
        %p326 = scmp.lt.s32.totalorder %s323, 3
        %s327 = scalar_select %p326, %s323, 3
        %s328 = smul.addr %s325, 4
        %s329 = sadd.s32 %s327, %s328
        %s330 = smul.addr %s329, 4
        %s331 = scalar_lea.vmem %s0, %s330
        %s332 = smul.u32 4, %s25
        %p333 = scmp.lt.s32.totalorder %s24, 1
        %s334 = scalar_select %p333, %s24, 1
        %s335 = smul.addr %s334, 4
        %s336 = smul.addr %s335, 4
        %s337 = scalar_lea.vmem %s1, %s336
        %p338 = scmp.lt.s32.totalorder %s24, 1
        %s339 = scalar_select %p338, %s24, 1
        %s340 = smul.addr %s339, 4
        %s341 = smul.addr %s340, 4
        %s342 = scalar_lea.vmem %s2, %s341
        %p343 = scmp.lt.s32.totalorder %s24, 1
        %s344 = scalar_select %p343, %s24, 1
        %p345 = scmp.lt.s32.totalorder %s25, 0
        %s346 = scalar_select %p345, %s25, 0
        %s347 = smul.addr %s344, 2
        %s348 = sadd.s32 %s346, %s347
        %s349 = smul.addr %s348, 8
        %s350 = scalar_lea.vmem %s3, %s349
        %v352 = vld [vmem:[%s331] sm:$0xf]
        %v353 = vld [vmem:[%s331 + $0x4] sm:$0xf]
        %v354 = vld [vmem:[%s331 + $0x8] sm:$0xf]
        %v355 = vld [vmem:[%s331 + $0xc] sm:$0xf]
        %v356 = vld [vmem:[%s337] sm:$0xf]
        %v357 = vld [vmem:[%s337 + $0x4] sm:$0xf]
        %v358 = vld [vmem:[%s337 + $0x8] sm:$0xf]
        %v359 = vld [vmem:[%s337 + $0xc] sm:$0xf]
        %v360 = vld [vmem:[%s342] sm:$0xf]
        %v361 = vld [vmem:[%s342 + $0x4] sm:$0xf]
        %v362 = vld [vmem:[%s342 + $0x8] sm:$0xf]
        %v363 = vld [vmem:[%s342 + $0xc] sm:$0xf]
        %v368 = vunpack.c.l.b16 %v352
        %v369 = vunpack.c.l.b16 %v353
        %v370 = vunpack.c.l.b16 %v354
        %v371 = vunpack.c.l.b16 %v355
        %v372 = vpack.c.b16 %v369, %v368
        %v373 = vpack.c.b16 %v371, %v370
        %v378 = vunpack.c.l.b16 %v356
        %v379 = vunpack.c.l.b16 %v357
        %v380 = vunpack.c.l.b16 %v358
        %v381 = vunpack.c.l.b16 %v359
        %v382 = vpack.c.b16 %v379, %v378
        %v383 = vpack.c.b16 %v381, %v380
        %vm384 = vcmask 64512
        %v386 = vsel %vm384, %v372, 0
        %v389 = vsel %vm384, %v373, 0
        %v392 = vsel %vm384, %v382, 0
        %v395 = vsel %vm384, %v383, 0
        %397 = vmatprep.subr.bf16.mxu0 0
        %398 = vmatpush1.bf16.xpose.msra.mxu0 %v392
        %399 = vmatprep.subr.bf16.mxu0 0
        %400 = vmatpush1.bf16.xpose.msra.mxu0 %v395
        %401 = vmatprep.subr.bf16.mxu0 0
        %402 = vmatpush1.bf16.xpose.msra.mxu0 0
        %403 = vmatprep.subr.bf16.mxu0 0
        %404 = vmatpush1.bf16.xpose.msra.mxu0 0
        %405 = vmatprep.subr.bf16.mxu0 0
        %406 = vmatpush1.bf16.xpose.msra.mxu0 0
        %407 = vmatprep.subr.bf16.mxu0 0
        %408 = vmatpush1.bf16.xpose.msra.mxu0 0
        %409 = vmatprep.subr.bf16.mxu0 0
        %410 = vmatpush1.bf16.xpose.msra.mxu0 0
        %411 = vmatprep.subr.bf16.mxu0 0
        %412 = vmatpush1.bf16.xpose.msra.mxu0 0
        %413 = vmatprep.subr.bf16.mxu0 0
        %414 = vmatpush1.bf16.xpose.msra.mxu0 0
        %415 = vmatprep.subr.bf16.mxu0 0
        %416 = vmatpush1.bf16.xpose.msra.mxu0 0
        %417 = vmatprep.subr.bf16.mxu0 0
        %418 = vmatpush1.bf16.xpose.msra.mxu0 0
        %419 = vmatprep.subr.bf16.mxu0 0
        %420 = vmatpush1.bf16.xpose.msra.mxu0 0
        %421 = vmatprep.subr.bf16.mxu0 0
        %422 = vmatpush1.bf16.xpose.msra.mxu0 0
        %423 = vmatprep.subr.bf16.mxu0 0
        %424 = vmatpush1.bf16.xpose.msra.mxu0 0
        %425 = vmatprep.subr.bf16.mxu0 0
        %426 = vmatpush1.bf16.xpose.msra.mxu0 0
        %427 = vmatprep.subr.bf16.mxu0 0
        %428 = vmatpush1.bf16.xpose.msra.mxu0 0
        %429 = vmatprep.mubr.bf16.mxu0 0
        %430 = vmatmul.mubr.bf16.gmra.mrb[0].mxu0 %v386
        %v431 = vpop.f32.mrb[0].mxu0
        %v432 = vadd.f32 0.0, %v431
        %v433 = vpop.f32.mrb[0].mxu0
        %v434 = vpop.f32.mrb[0].mxu0
        %v435 = vadd.f32 0.0, %v434
        %v436 = vpop.f32.mrb[0].mxu0
        %437 = vmatprep.mubr.bf16.mxu0 0
        %438 = vmatmul.mubr.bf16.gmra.mrb[0].mxu0 %v389
        %v439 = vpop.f32.mrb[0].mxu0
        %v440 = vadd.f32 0.0, %v439
        %v441 = vpop.f32.mrb[0].mxu0
        %v442 = vpop.f32.mrb[0].mxu0
        %v443 = vadd.f32 0.0, %v442
        %v444 = vpop.f32.mrb[0].mxu0
        %445 = vdwg.mxu0
        %v446 = vpack.c.bf16 %v435, %v432
        %v447 = vpack.c.bf16 %v443, %v440
        %v452 = vunpack.c.l.b16 %v360
        %v453 = vunpack.c.l.b16 %v361
        %v454 = vunpack.c.l.b16 %v362
        %v455 = vunpack.c.l.b16 %v363
        %v456 = vpack.c.b16 %v453, %v452
        %v457 = vpack.c.b16 %v455, %v454
        %vm460 = vcmask 261120
        %v462 = vsel %vm460, %v446, 0
        %v465 = vsel %vm460, %v447, 0
        %467 = vmatprep.subr.bf16.mxu0 0
        %468 = vmatpush1.bf16.msra.mxu0 %v456
        %469 = vmatprep.subr.bf16.mxu0 0
        %470 = vmatpush1.bf16.msra.mxu0 %v457
        %471 = vmatprep.subr.bf16.mxu0 0
        %472 = vmatpush1.bf16.msra.mxu0 0
        %473 = vmatprep.subr.bf16.mxu0 0
        %474 = vmatpush1.bf16.msra.mxu0 0
        %475 = vmatprep.subr.bf16.mxu0 0
        %476 = vmatpush1.bf16.msra.mxu0 0
        %477 = vmatprep.subr.bf16.mxu0 0
        %478 = vmatpush1.bf16.msra.mxu0 0
        %479 = vmatprep.subr.bf16.mxu0 0
        %480 = vmatpush1.bf16.msra.mxu0 0
        %481 = vmatprep.subr.bf16.mxu0 0
        %482 = vmatpush1.bf16.msra.mxu0 0
        %483 = vmatprep.subr.bf16.mxu0 0
        %484 = vmatpush1.bf16.msra.mxu0 0
        %485 = vmatprep.subr.bf16.mxu0 0
        %486 = vmatpush1.bf16.msra.mxu0 0
        %487 = vmatprep.subr.bf16.mxu0 0
        %488 = vmatpush1.bf16.msra.mxu0 0
        %489 = vmatprep.subr.bf16.mxu0 0
        %490 = vmatpush1.bf16.msra.mxu0 0
        %491 = vmatprep.subr.bf16.mxu0 0
        %492 = vmatpush1.bf16.msra.mxu0 0
        %493 = vmatprep.subr.bf16.mxu0 0
        %494 = vmatpush1.bf16.msra.mxu0 0
        %495 = vmatprep.subr.bf16.mxu0 0
        %496 = vmatpush1.bf16.msra.mxu0 0
        %497 = vmatprep.subr.bf16.mxu0 0
        %498 = vmatpush1.bf16.msra.mxu0 0
        %499 = vmatprep.mubr.bf16.mxu0 0
        %500 = vmatmul.mubr.bf16.gmra.mrb[0].mxu0 %v462
        %v501 = vpop.f32.mrb[0].mxu0
        %v502 = vadd.f32 0.0, %v501
        %v503 = vpop.f32.mrb[0].mxu0
        %v504 = vpop.f32.mrb[0].mxu0
        %v505 = vadd.f32 0.0, %v504
        %v506 = vpop.f32.mrb[0].mxu0
        %507 = vmatprep.mubr.bf16.mxu0 0
        %508 = vmatmul.mubr.bf16.gmra.mrb[0].mxu0 %v465
        %v509 = vpop.f32.mrb[0].mxu0
        %v510 = vadd.f32 0.0, %v509
        %v511 = vpop.f32.mrb[0].mxu0
        %v512 = vpop.f32.mrb[0].mxu0
        %v513 = vadd.f32 0.0, %v512
        %v514 = vpop.f32.mrb[0].mxu0
        %515 = vdwg.mxu0
        %v516 = vld [vmem:[%s4] sm:$0xf]
        %v517 = vld [vmem:[%s4 + $0x4] sm:$0xf]
        %v518 = vpack.c.bf16 %v505, %v502
        %v519 = vpack.c.bf16 %v513, %v510
        %v520 = vld [vmem:[%s5] sm:$0xff]
        %v521 = vld [vmem:[%s5 + $0x8] sm:$0xff]
        %523 = vset.pattern.permute.xlu0 0
        %524 = vperm.xlu0 %523, %v520
        %v525 = vpop.permute.xlu0 %524
        %528 = vset.pattern.permute.xlu0 0
        %529 = vperm.xlu0 %528, %v521
        %v530 = vpop.permute.xlu0 %529
        %v534 = vunpack.c.l.b16 %v516
        %v535 = vunpack.c.l.b16 %v517
        %v536 = vpack.c.b16 %v535, %v534
        %v538 = vsel %vm384, %v536, 0
        %v541 = vsel %vm384, %v518, 0
        %v544 = vsel %vm384, %v519, 0
        %546 = vmatprep.subr.bf16.mxu0 0
        %547 = vmatpush1.bf16.xpose.msra.mxu0 %v541
        %548 = vmatprep.subr.bf16.mxu0 0
        %549 = vmatpush1.bf16.xpose.msra.mxu0 %v544
        %550 = vmatprep.subr.bf16.mxu0 0
        %551 = vmatpush1.bf16.xpose.msra.mxu0 0
        %552 = vmatprep.subr.bf16.mxu0 0
        %553 = vmatpush1.bf16.xpose.msra.mxu0 0
        %554 = vmatprep.subr.bf16.mxu0 0
        %555 = vmatpush1.bf16.xpose.msra.mxu0 0
        %556 = vmatprep.subr.bf16.mxu0 0
        %557 = vmatpush1.bf16.xpose.msra.mxu0 0
        %558 = vmatprep.subr.bf16.mxu0 0
        %559 = vmatpush1.bf16.xpose.msra.mxu0 0
        %560 = vmatprep.subr.bf16.mxu0 0
        %561 = vmatpush1.bf16.xpose.msra.mxu0 0
        %562 = vmatprep.subr.bf16.mxu0 0
        %563 = vmatpush1.bf16.xpose.msra.mxu0 0
        %564 = vmatprep.subr.bf16.mxu0 0
        %565 = vmatpush1.bf16.xpose.msra.mxu0 0
        %566 = vmatprep.subr.bf16.mxu0 0
        %567 = vmatpush1.bf16.xpose.msra.mxu0 0
        %568 = vmatprep.subr.bf16.mxu0 0
        %569 = vmatpush1.bf16.xpose.msra.mxu0 0
        %570 = vmatprep.subr.bf16.mxu0 0
        %571 = vmatpush1.bf16.xpose.msra.mxu0 0
        %572 = vmatprep.subr.bf16.mxu0 0
        %573 = vmatpush1.bf16.xpose.msra.mxu0 0
        %574 = vmatprep.subr.bf16.mxu0 0
        %575 = vmatpush1.bf16.xpose.msra.mxu0 0
        %576 = vmatprep.subr.bf16.mxu0 0
        %577 = vmatpush1.bf16.xpose.msra.mxu0 0
        %578 = vmatprep.mubr.bf16.mxu0 0
        %579 = vmatmul.mubr.bf16.gmra.mrb[0].mxu0 %v538
        %v580 = vpop.f32.mrb[0].mxu0
        %v581 = vadd.f32 %v525, %v580
        %v582 = vpop.f32.mrb[0].mxu0
        %v583 = vpop.f32.mrb[0].mxu0
        %v584 = vadd.f32 %v530, %v583
        %v585 = vpop.f32.mrb[0].mxu0
        %586 = vdwg.mxu0
        %v587 = vld [vmem:[%s350] sm:$0xff]
        %v588 = vld [vmem:[%s350 + $0x8] sm:$0xff]
        %v589 = vadd.f32 %v581, %v587
        %v590 = vadd.f32 %v584, %v588
        %591 = vst.msk [vmem:[%s322] sm:$0xff] %vm460, %v589
        %592 = vst.msk [vmem:[%s322 + $0x8] sm:$0xff] %vm460, %v590
        %s593 = sand.u32 %s192, 1
        %s594 = scalar_lea.sflag [#allocation3], %s593
        %s595 = sand.u32 %s192, 1
        %s596 = smul.addr %s595, 16
        %s597 = scalar_lea.vmem [#allocation2], %s596
        // Predicated region
        $region45: #{rs_gcn_forward.3} parent=43 // pred_check
          %p598 = pneg %p202
        $region46: #{rs_gcn_forward.3} parent=43 // pred_check_branch
          %600 = sbr.rel (%p598) target = $region48
        $region47: #{rs_gcn_forward.3} parent=43 // pred_region
          %s602 = ssub.s32 256, 256
          %603 = vsyncadd %s594, %s602
          %s604 = smul.addr %s24, 2
          %s605 = sadd.s32 %s25, %s604
          %s606 = smul.addr %s605, 128
          %s607 = scalar_lea.hbm %s6, %s606
          %s608 = sshll.u32 %s597, 4
          %s609 = int_to_ptr.vmem [resolvable:$true] %s608
          %614 = dma.vmem_to_hbm [thread:$0]  %s609, 256, %s607, %s594, 128, 128, 8
        $region48: #{rs_gcn_forward.3} parent=43 // pred_fallthru
          _
      $region44: #{rs_gcn_forward.3} parent=5 // pred_fallthru
        _
      %p615 = scmp.le.s32.totalorder 2, %s15
      // Predicated region
      $region49: #{rs_gcn_forward.3} parent=5 // pred_check
        %p616 = pneg %p615
      $region50: #{rs_gcn_forward.3} parent=5 // pred_check_branch
        %618 = sbr.rel (%p616) target = $region52
      $region51: #{rs_gcn_forward.3} parent=5 // pred_region
        %s619 = ssub.s32 %s15, 2
        // Predicated region
        $region53: #{rs_gcn_forward.3} parent=51 // pred_check
          %p620 = pneg %p208
        $region54: #{rs_gcn_forward.3} parent=51 // pred_check_branch
          %622 = sbr.rel (%p620) target = $region56
        $region55: #{rs_gcn_forward.3} parent=51 // pred_region
          %s623 = sand.u32 %s193, 1
          %s624 = scalar_lea.sflag [#allocation3], %s623
          %s625 = sand.u32 %s193, 1
          %s626 = smul.addr %s625, 16
          %s627 = scalar_lea.vmem [#allocation2], %s626
          %628 = dma.done %s624, 256
        $region56: #{rs_gcn_forward.3} parent=51 // pred_fallthru
          _
      $region52: #{rs_gcn_forward.3} parent=5 // pred_fallthru
        _
    $region6: #{rs_gcn_forward.3} parent=1 // loop_footer
      %s19 = sadd.s32 1, %s15
    $region7: #{rs_gcn_forward.3} parent=1 // loop_footer_branch
      %14 = sbr.rel target = $region3
    $region8: #{rs_gcn_forward.3} parent=1 // loop_exit
      _
    %629 = vsyncpa [#allocation3], 1
    %s630 = scalar_lea.sflag [#allocation3], 1
    %631 = vsyncpa %s630, 1

// kernel: rs_gcn_forward.2
$region0: #{rs_gcn_forward.2}
  #allocation0 [shape = 'u32[]', space=smem, size = 0x4, offset = 0x4, fixed_abs, tag = 'smem constant byte address 0x4 - core index']
  #allocation1 [shape = 'u32[144,128]{1,0:T(1,128)}', space=vmem, size = 0x12000, scoped, tag = 'internal scratch']
  %s0 = inlined_call_operand.vmem [shape: f32[2,16,32], index: 0, kind: input, shape index: {}]
  %s1 = inlined_call_operand.vmem [shape: bf16[16,24], index: 1, kind: input, shape index: {}]
  %s2 = inlined_call_operand.vmem [shape: f32[1,24], index: 2, kind: input, shape index: {}]
  %s3 = inlined_call_operand.vmem [shape: bf16[2,32,8], index: 3, kind: output, shape index: {0}]
  %s4 = inlined_call_operand.vmem [shape: bf16[2,32,8], index: 4, kind: output, shape index: {1}]
  %s5 = inlined_call_operand.vmem [shape: bf16[2,32,8], index: 5, kind: output, shape index: {2}]
  %6 = xla_tuple %s3, %s4, %s5
  %s7 = sld [smem:[#allocation0]]
  $region61: #{rs_gcn_forward.2} parent=0
    _
  %s9 = ssub.s32 1, %s7
  %s10 = scalar_select 0, %s9, %s7
  loop: start=0, step=1, limit=4
  $region2: #{rs_gcn_forward.2} parent=0 // loop_pre_header
    _
  $region3: #{rs_gcn_forward.2} parent=0 // loop_header
    %s12 = sphi 0, %s16
    %p13 = scmp.ge.s32.totalorder %s12, 4
    %s19 = sphi 0, %s31
    %s20 = sphi 0, %s27
    %s21 = sphi 0, %s19
    %s22 = sphi 0, %s20
    %s23 = sphi 0, %s21
    %s24 = sphi 0, %s22
    %s36 = sphi 0, %s38
    %s39 = sphi 0, %s36
    %s40 = sphi 0, %s39
    %s56 = sphi 0, %s40
    %s60 = sphi 0, %s60
    %s62 = sphi 0, %s60
    %s63 = sphi 0, %s62
    %s77 = sphi 0, %s63
    %s81 = sphi 0, %s81
    %s83 = sphi 0, %s81
    %s84 = sphi 0, %s83
    %s98 = sphi 0, %s84
    %s106 = sphi 0, %s108
    %s109 = sphi 0, %s106
    %s110 = sphi 0, %s109
    %s126 = sphi 0, %s110
    %s134 = sphi 0, %s136
    %s137 = sphi 0, %s134
    %s138 = sphi 0, %s137
    %s154 = sphi 0, %s138
    %s162 = sphi 0, %s164
    %s165 = sphi 0, %s162
    %s166 = sphi 0, %s165
    %s182 = sphi 0, %s166
  $region4: #{rs_gcn_forward.2} parent=0 // loop_header_branch
    %15 = sbr.rel (%p13) target = $region8
  $region5: #{rs_gcn_forward.2} parent=0 // loop_body
    %s17 = ssub.s32 %s12, 1
    %s18 = ssub.s32 %s12, 2
    %s25 = sadd.s32 1, %s20
    %p26 = scmp.ge.s32.totalorder %s25, 1
    %s27 = scalar_select %p26, 0, %s25
    %s28 = sadd.s32 1, %s19
    %s29 = scalar_select %p26, %s28, %s19
    %p30 = scmp.ge.s32.totalorder %s29, 2
    %s31 = scalar_select %p30, 0, %s29
    %s32 = ssub.s32 %s19, %s31
    %s33 = ssub.s32 %s20, %s27
    %s34 = sor.u32 %s32, %s33
    %p35 = scmp.eq.s32.totalorder %s34, 0
    %s37 = sadd.s32 %s36, 1
    %s38 = scalar_select %p35, %s36, %s37
    %p41 = pneg %p35
    %p42 = scmp.eq.s32.totalorder %s12, 1
    %p43 = por %p41, %p42
    %p44 = scmp.ne.s32.totalorder %s36, %s39
    %p45 = scmp.eq.s32.totalorder %s12, 0
    %p46 = por %p44, %p45
    %p47 = scmp.ne.s32.totalorder %s36, %s39
    %p48 = scmp.eq.s32.totalorder %s17, 1
    %p49 = por %p47, %p48
    %p50 = scmp.ne.s32.totalorder %s39, %s40
    %p51 = scmp.eq.s32.totalorder %s17, 0
    %p52 = por %p50, %p51
    %p53 = scmp.ne.s32.totalorder %s39, %s40
    %p54 = scmp.eq.s32.totalorder %s18, 1
    %p55 = por %p53, %p54
    %p57 = scmp.ne.s32.totalorder %s40, %s56
    %p58 = scmp.eq.s32.totalorder %s18, 0
    %p59 = por %p57, %p58
    %s61 = sadd.s32 %s60, 1
    %p64 = scmp.eq.s32.totalorder %s12, 1
    %p65 = scmp.ne.s32.totalorder %s60, %s62
    %p66 = scmp.eq.s32.totalorder %s12, 0
    %p67 = por %p65, %p66
    %p68 = scmp.ne.s32.totalorder %s60, %s62
    %p69 = scmp.eq.s32.totalorder %s17, 1
    %p70 = por %p68, %p69
    %p71 = scmp.ne.s32.totalorder %s62, %s63
    %p72 = scmp.eq.s32.totalorder %s17, 0
    %p73 = por %p71, %p72
    %p74 = scmp.ne.s32.totalorder %s62, %s63
    %p75 = scmp.eq.s32.totalorder %s18, 1
    %p76 = por %p74, %p75
    %p78 = scmp.ne.s32.totalorder %s63, %s77
    %p79 = scmp.eq.s32.totalorder %s18, 0
    %p80 = por %p78, %p79
    %s82 = sadd.s32 %s81, 1
    %p85 = scmp.eq.s32.totalorder %s12, 1
    %p86 = scmp.ne.s32.totalorder %s81, %s83
    %p87 = scmp.eq.s32.totalorder %s12, 0
    %p88 = por %p86, %p87
    %p89 = scmp.ne.s32.totalorder %s81, %s83
    %p90 = scmp.eq.s32.totalorder %s17, 1
    %p91 = por %p89, %p90
    %p92 = scmp.ne.s32.totalorder %s83, %s84
    %p93 = scmp.eq.s32.totalorder %s17, 0
    %p94 = por %p92, %p93
    %p95 = scmp.ne.s32.totalorder %s83, %s84
    %p96 = scmp.eq.s32.totalorder %s18, 1
    %p97 = por %p95, %p96
    %p99 = scmp.ne.s32.totalorder %s84, %s98
    %p100 = scmp.eq.s32.totalorder %s18, 0
    %p101 = por %p99, %p100
    %s102 = ssub.s32 %s19, %s31
    %s103 = ssub.s32 %s20, %s27
    %s104 = sor.u32 %s102, %s103
    %p105 = scmp.eq.s32.totalorder %s104, 0
    %s107 = sadd.s32 %s106, 1
    %s108 = scalar_select %p105, %s106, %s107
    %p111 = pneg %p105
    %p112 = scmp.eq.s32.totalorder %s12, 1
    %p113 = por %p111, %p112
    %p114 = scmp.ne.s32.totalorder %s106, %s109
    %p115 = scmp.eq.s32.totalorder %s12, 0
    %p116 = por %p114, %p115
    %p117 = scmp.ne.s32.totalorder %s106, %s109
    %p118 = scmp.eq.s32.totalorder %s17, 1
    %p119 = por %p117, %p118
    %p120 = scmp.ne.s32.totalorder %s109, %s110
    %p121 = scmp.eq.s32.totalorder %s17, 0
    %p122 = por %p120, %p121
    %p123 = scmp.ne.s32.totalorder %s109, %s110
    %p124 = scmp.eq.s32.totalorder %s18, 1
    %p125 = por %p123, %p124
    %p127 = scmp.ne.s32.totalorder %s110, %s126
    %p128 = scmp.eq.s32.totalorder %s18, 0
    %p129 = por %p127, %p128
    %s130 = ssub.s32 %s19, %s31
    %s131 = ssub.s32 %s20, %s27
    %s132 = sor.u32 %s130, %s131
    %p133 = scmp.eq.s32.totalorder %s132, 0
    %s135 = sadd.s32 %s134, 1
    %s136 = scalar_select %p133, %s134, %s135
    %p139 = pneg %p133
    %p140 = scmp.eq.s32.totalorder %s12, 1
    %p141 = por %p139, %p140
    %p142 = scmp.ne.s32.totalorder %s134, %s137
    %p143 = scmp.eq.s32.totalorder %s12, 0
    %p144 = por %p142, %p143
    %p145 = scmp.ne.s32.totalorder %s134, %s137
    %p146 = scmp.eq.s32.totalorder %s17, 1
    %p147 = por %p145, %p146
    %p148 = scmp.ne.s32.totalorder %s137, %s138
    %p149 = scmp.eq.s32.totalorder %s17, 0
    %p150 = por %p148, %p149
    %p151 = scmp.ne.s32.totalorder %s137, %s138
    %p152 = scmp.eq.s32.totalorder %s18, 1
    %p153 = por %p151, %p152
    %p155 = scmp.ne.s32.totalorder %s138, %s154
    %p156 = scmp.eq.s32.totalorder %s18, 0
    %p157 = por %p155, %p156
    %s158 = ssub.s32 %s19, %s31
    %s159 = ssub.s32 %s20, %s27
    %s160 = sor.u32 %s158, %s159
    %p161 = scmp.eq.s32.totalorder %s160, 0
    %s163 = sadd.s32 %s162, 1
    %s164 = scalar_select %p161, %s162, %s163
    %p167 = pneg %p161
    %p168 = scmp.eq.s32.totalorder %s12, 1
    %p169 = por %p167, %p168
    %p170 = scmp.ne.s32.totalorder %s162, %s165
    %p171 = scmp.eq.s32.totalorder %s12, 0
    %p172 = por %p170, %p171
    %p173 = scmp.ne.s32.totalorder %s162, %s165
    %p174 = scmp.eq.s32.totalorder %s17, 1
    %p175 = por %p173, %p174
    %p176 = scmp.ne.s32.totalorder %s165, %s166
    %p177 = scmp.eq.s32.totalorder %s17, 0
    %p178 = por %p176, %p177
    %p179 = scmp.ne.s32.totalorder %s165, %s166
    %p180 = scmp.eq.s32.totalorder %s18, 1
    %p181 = por %p179, %p180
    %p183 = scmp.ne.s32.totalorder %s166, %s182
    %p184 = scmp.eq.s32.totalorder %s18, 0
    %p185 = por %p183, %p184
    %p186 = scmp.le.s32.totalorder 1, %s12
    %p187 = scmp.lt.s32.totalorder %s12, 3
    %p188 = pnand %p186, %p187
    %p189 = pneg %p188
    // Predicated region
    $region9: #{rs_gcn_forward.2} parent=5 // pred_check
      _
    $region10: #{rs_gcn_forward.2} parent=5 // pred_check_branch
      %191 = sbr.rel (%p188) target = $region12
    $region11: #{rs_gcn_forward.2} parent=5 // pred_region
      %s192 = ssub.s32 %s12, 1
      // Predicated region
      $region13: #{rs_gcn_forward.2} parent=11 // pred_check
        %p193 = pneg %p73
      $region14: #{rs_gcn_forward.2} parent=11 // pred_check_branch
        %195 = sbr.rel (%p193) target = $region16
      $region15: #{rs_gcn_forward.2} parent=11 // pred_region
        _
      $region16: #{rs_gcn_forward.2} parent=11 // pred_fallthru
        _
      // Predicated region
      $region17: #{rs_gcn_forward.2} parent=11 // pred_check
        %p196 = pneg %p94
      $region18: #{rs_gcn_forward.2} parent=11 // pred_check_branch
        %198 = sbr.rel (%p196) target = $region20
      $region19: #{rs_gcn_forward.2} parent=11 // pred_region
        _
      $region20: #{rs_gcn_forward.2} parent=11 // pred_fallthru
        _
    $region12: #{rs_gcn_forward.2} parent=5 // pred_fallthru
      _
    %p199 = scmp.lt.s32.totalorder %s12, 2
    // Predicated region
    $region21: #{rs_gcn_forward.2} parent=5 // pred_check
      %p200 = pneg %p199
    $region22: #{rs_gcn_forward.2} parent=5 // pred_check_branch
      %202 = sbr.rel (%p200) target = $region24
    $region23: #{rs_gcn_forward.2} parent=5 // pred_region
      // Predicated region
      $region25: #{rs_gcn_forward.2} parent=23 // pred_check
        %p203 = pneg %p46
      $region26: #{rs_gcn_forward.2} parent=23 // pred_check_branch
        %205 = sbr.rel (%p203) target = $region28
      $region27: #{rs_gcn_forward.2} parent=23 // pred_region
        %p206 = scmp.lt.s32.totalorder %s19, 1
        %s207 = scalar_select %p206, %s19, 1
        %p208 = scmp.lt.s32.totalorder %s20, 0
        %s209 = scalar_select %p208, %s20, 0
        %s210 = smul.addr %s207, 2
        %s211 = sadd.s32 %s209, %s210
        %s212 = smul.addr %s211, 8
        %s213 = scalar_lea.vmem %s0, %s212
      $region28: #{rs_gcn_forward.2} parent=23 // pred_fallthru
        _
    $region24: #{rs_gcn_forward.2} parent=5 // pred_fallthru
      _
    %p214 = scmp.le.s32.totalorder 1, %s12
    %p215 = scmp.lt.s32.totalorder %s12, 3
    %p216 = pnand %p214, %p215
    %p217 = pneg %p216
    // Predicated region
    $region29: #{rs_gcn_forward.2} parent=5 // pred_check
      _
    $region30: #{rs_gcn_forward.2} parent=5 // pred_check_branch
      %219 = sbr.rel (%p216) target = $region32
    $region31: #{rs_gcn_forward.2} parent=5 // pred_region
      %s220 = ssub.s32 %s12, 1
      %p221 = scmp.lt.s32.totalorder %s21, 1
      %s222 = scalar_select %p221, %s21, 1
      %p223 = scmp.lt.s32.totalorder %s22, 0
      %s224 = scalar_select %p223, %s22, 0
      %s225 = smul.addr %s222, 2
      %s226 = sadd.s32 %s224, %s225
      %s227 = smul.addr %s226, 8
      %s228 = scalar_lea.vmem %s0, %s227
      %p229 = pneg %p52
      %p230 = pneg %p49
      %p231 = pneg %p73
      %p232 = pneg %p70
      %p233 = pneg %p94
      %p234 = pneg %p91
      %p235 = pneg %p122
      %p236 = pneg %p119
      %s237 = smul.u32 4, %s22
      %p238 = scmp.lt.s32.totalorder %s21, 1
      %s239 = scalar_select %p238, %s21, 1
      %p240 = scmp.lt.s32.totalorder %s237, 3
      %s241 = scalar_select %p240, %s237, 3
      %s242 = smul.addr %s239, 4
      %s243 = sadd.s32 %s241, %s242
      %s244 = smul.addr %s243, 4
      %s245 = scalar_lea.vmem %s3, %s244
      %p246 = pneg %p150
      %p247 = pneg %p147
      %s248 = smul.u32 4, %s22
      %p249 = scmp.lt.s32.totalorder %s21, 1
      %s250 = scalar_select %p249, %s21, 1
      %p251 = scmp.lt.s32.totalorder %s248, 3
      %s252 = scalar_select %p251, %s248, 3
      %s253 = smul.addr %s250, 4
      %s254 = sadd.s32 %s252, %s253
      %s255 = smul.addr %s254, 4
      %s256 = scalar_lea.vmem %s4, %s255
      %p257 = pneg %p178
      %p258 = pneg %p175
      %s259 = smul.u32 4, %s22
      %p260 = scmp.lt.s32.totalorder %s21, 1
      %s261 = scalar_select %p260, %s21, 1
      %p262 = scmp.lt.s32.totalorder %s259, 3
      %s263 = scalar_select %p262, %s259, 3
      %s264 = smul.addr %s261, 4
      %s265 = sadd.s32 %s263, %s264
      %s266 = smul.addr %s265, 4
      %s267 = scalar_lea.vmem %s5, %s266
      %p268 = scmp.lt.s32.totalorder %s21, 1
      %s269 = scalar_select %p268, %s21, 1
      %p270 = scmp.lt.s32.totalorder %s22, 0
      %s271 = scalar_select %p270, %s22, 0
      %s272 = smul.addr %s269, 2
      %s273 = sadd.s32 %s271, %s272
      %s274 = smul.addr %s273, 8
      %s275 = scalar_lea.vmem %s0, %s274
      %s276 = smul.u32 4, %s22
      %p277 = scmp.lt.s32.totalorder %s21, 1
      %s278 = scalar_select %p277, %s21, 1
      %p279 = scmp.lt.s32.totalorder %s276, 3
      %s280 = scalar_select %p279, %s276, 3
      %s281 = smul.addr %s278, 4
      %s282 = sadd.s32 %s280, %s281
      %s283 = smul.addr %s282, 4
      %s284 = scalar_lea.vmem %s3, %s283
      %s285 = smul.u32 4, %s22
      %s286 = smul.u32 4, %s22
      %p287 = scmp.lt.s32.totalorder %s21, 1
      %s288 = scalar_select %p287, %s21, 1
      %p289 = scmp.lt.s32.totalorder %s286, 3
      %s290 = scalar_select %p289, %s286, 3
      %s291 = smul.addr %s288, 4
      %s292 = sadd.s32 %s290, %s291
      %s293 = smul.addr %s292, 4
      %s294 = scalar_lea.vmem %s4, %s293
      %s295 = smul.u32 4, %s22
      %s296 = smul.u32 4, %s22
      %p297 = scmp.lt.s32.totalorder %s21, 1
      %s298 = scalar_select %p297, %s21, 1
      %p299 = scmp.lt.s32.totalorder %s296, 3
      %s300 = scalar_select %p299, %s296, 3
      %s301 = smul.addr %s298, 4
      %s302 = sadd.s32 %s300, %s301
      %s303 = smul.addr %s302, 4
      %s304 = scalar_lea.vmem %s5, %s303
      %s305 = smul.u32 4, %s22
      %v307 = vld [vmem:[%s275] sm:$0xff]
      %v308 = vld [vmem:[%s275 + $0x8] sm:$0xff]
      %v309 = vpack.c.bf16 %v308, %v307
      %v310 = vld [vmem:[%s1] sm:$0xf]
      %v311 = vld [vmem:[%s1 + $0x4] sm:$0xf]
      %v312 = vld [vmem:[%s2] sm:$0x1]
      %v314 = vlaneseq
      %v315 = vshrl.u32 %v314, 7
      %v316 = vsub.s32 0, %v315
      %v317 = vrot.slane %v312, %v316
      %319 = vxpose.xlu0.c.b16.start [1/8] %v309, 128
      %320 = vxpose.xlu0.c.b16.cont [2/8] 0, 128
      %321 = vxpose.xlu0.c.b16.cont [3/8] 0, 128
      %322 = vxpose.xlu0.c.b16.cont [4/8] 0, 128
      %323 = vxpose.xlu0.c.b16.cont [5/8] 0, 128
      %324 = vxpose.xlu0.c.b16.cont [6/8] 0, 128
      %325 = vxpose.xlu0.c.b16.cont [7/8] 0, 128
      %326 = vxpose.xlu0.c.b16.end [8/8] 0, 128
      %v327 = vpop.trf.xlu0
      %v328 = vpop.trf.xlu0
      %v329 = vpop.trf.xlu0
      %v330 = vpop.trf.xlu0
      %v331 = vpop.trf.xlu0
      %v332 = vpop.trf.xlu0
      %v333 = vpop.trf.xlu0
      %v334 = vpop.trf.xlu0
      %v337 = vunpack.c.l.b16 %v310
      %v338 = vunpack.c.l.b16 %v311
      %v339 = vpack.c.b16 %v338, %v337
      %vm341 = vcmask 130048
      %v343 = vsel %vm341, %v327, 0
      %v346 = vsel %vm341, %v328, 0
      %348 = vmatprep.subr.bf16.mxu0 0
      %349 = vmatpush1.bf16.msra.mxu0 %v339
      %350 = vmatprep.subr.bf16.mxu0 0
      %351 = vmatpush1.bf16.msra.mxu0 0
      %352 = vmatprep.subr.bf16.mxu0 0
      %353 = vmatpush1.bf16.msra.mxu0 0
      %354 = vmatprep.subr.bf16.mxu0 0
      %355 = vmatpush1.bf16.msra.mxu0 0
      %356 = vmatprep.subr.bf16.mxu0 0
      %357 = vmatpush1.bf16.msra.mxu0 0
      %358 = vmatprep.subr.bf16.mxu0 0
      %359 = vmatpush1.bf16.msra.mxu0 0
      %360 = vmatprep.subr.bf16.mxu0 0
      %361 = vmatpush1.bf16.msra.mxu0 0
      %362 = vmatprep.subr.bf16.mxu0 0
      %363 = vmatpush1.bf16.msra.mxu0 0
      %364 = vmatprep.subr.bf16.mxu0 0
      %365 = vmatpush1.bf16.msra.mxu0 0
      %366 = vmatprep.subr.bf16.mxu0 0
      %367 = vmatpush1.bf16.msra.mxu0 0
      %368 = vmatprep.subr.bf16.mxu0 0
      %369 = vmatpush1.bf16.msra.mxu0 0
      %370 = vmatprep.subr.bf16.mxu0 0
      %371 = vmatpush1.bf16.msra.mxu0 0
      %372 = vmatprep.subr.bf16.mxu0 0
      %373 = vmatpush1.bf16.msra.mxu0 0
      %374 = vmatprep.subr.bf16.mxu0 0
      %375 = vmatpush1.bf16.msra.mxu0 0
      %376 = vmatprep.subr.bf16.mxu0 0
      %377 = vmatpush1.bf16.msra.mxu0 0
      %378 = vmatprep.subr.bf16.mxu0 0
      %379 = vmatpush1.bf16.msra.mxu0 0
      %380 = vmatprep.mubr.bf16.mxu0 0
      %381 = vmatmul.mubr.bf16.gmra.mrb[0].mxu0 %v343
      %v382 = vpop.f32.mrb[0].mxu0
      %v383 = vadd.f32 %v317, %v382
      %v384 = vpop.f32.mrb[0].mxu0
      %v385 = vpop.f32.mrb[0].mxu0
      %v386 = vadd.f32 %v317, %v385
      %v387 = vpop.f32.mrb[0].mxu0
      %388 = vmatprep.mubr.bf16.mxu0 0
      %389 = vmatmul.mubr.bf16.gmra.mrb[0].mxu0 %v346
      %v390 = vpop.f32.mrb[0].mxu0
      %v391 = vadd.f32 %v317, %v390
      %v392 = vpop.f32.mrb[0].mxu0
      %v393 = vpop.f32.mrb[0].mxu0
      %v394 = vadd.f32 %v317, %v393
      %v395 = vpop.f32.mrb[0].mxu0
      %396 = vdwg.mxu0
      %v397 = vpack.c.bf16 %v386, %v383
      %v398 = vpack.c.bf16 %v394, %v391
      %v401 = vunpack.c.l.b16 %v397
      %v402 = vunpack.c.h.b16 %v397
      %v403 = vunpack.c.l.b16 %v398
      %v404 = vunpack.c.h.b16 %v398
      %v405 = vpack.c.b16 %v401, %v401
      %v406 = vpack.c.b16 %v402, %v402
      %v407 = vpack.c.b16 %v403, %v403
      %v408 = vpack.c.b16 %v404, %v404
      %vm413 = vcmask 60416
      %414 = vst.msk [vmem:[%s284] sm:$0xf] %vm413, %v405
      %415 = vst.msk [vmem:[%s284 + $0x4] sm:$0xf] %vm413, %v406
      %416 = vst.msk [vmem:[%s284 + $0x8] sm:$0xf] %vm413, %v407
      %417 = vst.msk [vmem:[%s284 + $0xc] sm:$0xf] %vm413, %v408
      %418 = vrot.lane.b32.xlu0 %v405, 120
      %v419 = vpop.permute.xlu0 %418
      %420 = vrot.lane.b32.xlu0 %v406, 120
      %v421 = vpop.permute.xlu0 %420
      %422 = vrot.lane.b32.xlu0 %v407, 120
      %v423 = vpop.permute.xlu0 %422
      %424 = vrot.lane.b32.xlu0 %v408, 120
      %v425 = vpop.permute.xlu0 %424
      %430 = vst.msk [vmem:[%s294] sm:$0xf] %vm413, %v419
      %431 = vst.msk [vmem:[%s294 + $0x4] sm:$0xf] %vm413, %v421
      %432 = vst.msk [vmem:[%s294 + $0x8] sm:$0xf] %vm413, %v423
      %433 = vst.msk [vmem:[%s294 + $0xc] sm:$0xf] %vm413, %v425
      %434 = vrot.lane.b32.xlu0 %v405, 112
      %v435 = vpop.permute.xlu0 %434
      %436 = vrot.lane.b32.xlu0 %v406, 112
      %v437 = vpop.permute.xlu0 %436
      %438 = vrot.lane.b32.xlu0 %v407, 112
      %v439 = vpop.permute.xlu0 %438
      %440 = vrot.lane.b32.xlu0 %v408, 112
      %v441 = vpop.permute.xlu0 %440
      %446 = vst.msk [vmem:[%s304] sm:$0xf] %vm413, %v435
      %447 = vst.msk [vmem:[%s304 + $0x4] sm:$0xf] %vm413, %v437
      %448 = vst.msk [vmem:[%s304 + $0x8] sm:$0xf] %vm413, %v439
      %449 = vst.msk [vmem:[%s304 + $0xc] sm:$0xf] %vm413, %v441
      %s450 = smul.u32 4, %s22
      %p451 = scmp.lt.s32.totalorder %s21, 1
      %s452 = scalar_select %p451, %s21, 1
      %p453 = scmp.lt.s32.totalorder %s450, 3
      %s454 = scalar_select %p453, %s450, 3
      %s455 = smul.addr %s452, 4
      %s456 = sadd.s32 %s454, %s455
      %s457 = smul.addr %s456, 4
      %s458 = scalar_lea.vmem %s3, %s457
      %s459 = smul.u32 4, %s22
      %p460 = scmp.lt.s32.totalorder %s21, 1
      %s461 = scalar_select %p460, %s21, 1
      %p462 = scmp.lt.s32.totalorder %s459, 3
      %s463 = scalar_select %p462, %s459, 3
      %s464 = smul.addr %s461, 4
      %s465 = sadd.s32 %s463, %s464
      %s466 = smul.addr %s465, 4
      %s467 = scalar_lea.vmem %s4, %s466
      %s468 = smul.u32 4, %s22
      %p469 = scmp.lt.s32.totalorder %s21, 1
      %s470 = scalar_select %p469, %s21, 1
      %p471 = scmp.lt.s32.totalorder %s468, 3
      %s472 = scalar_select %p471, %s468, 3
      %s473 = smul.addr %s470, 4
      %s474 = sadd.s32 %s472, %s473
      %s475 = smul.addr %s474, 4
      %s476 = scalar_lea.vmem %s5, %s475
      // Predicated region
      $region33: #{rs_gcn_forward.2} parent=31 // pred_check
        %p477 = pneg %p119
      $region34: #{rs_gcn_forward.2} parent=31 // pred_check_branch
        %479 = sbr.rel (%p477) target = $region36
      $region35: #{rs_gcn_forward.2} parent=31 // pred_region
        %s480 = smul.u32 4, %s22
      $region36: #{rs_gcn_forward.2} parent=31 // pred_fallthru
        _
      // Predicated region
      $region37: #{rs_gcn_forward.2} parent=31 // pred_check
        %p481 = pneg %p147
      $region38: #{rs_gcn_forward.2} parent=31 // pred_check_branch
        %483 = sbr.rel (%p481) target = $region40
      $region39: #{rs_gcn_forward.2} parent=31 // pred_region
        %s484 = smul.u32 4, %s22
      $region40: #{rs_gcn_forward.2} parent=31 // pred_fallthru
        _
      // Predicated region
      $region41: #{rs_gcn_forward.2} parent=31 // pred_check
        %p485 = pneg %p175
      $region42: #{rs_gcn_forward.2} parent=31 // pred_check_branch
        %487 = sbr.rel (%p485) target = $region44
      $region43: #{rs_gcn_forward.2} parent=31 // pred_region
        %s488 = smul.u32 4, %s22
      $region44: #{rs_gcn_forward.2} parent=31 // pred_fallthru
        _
    $region32: #{rs_gcn_forward.2} parent=5 // pred_fallthru
      _
    %p489 = scmp.le.s32.totalorder 2, %s12
    // Predicated region
    $region45: #{rs_gcn_forward.2} parent=5 // pred_check
      %p490 = pneg %p489
    $region46: #{rs_gcn_forward.2} parent=5 // pred_check_branch
      %492 = sbr.rel (%p490) target = $region48
    $region47: #{rs_gcn_forward.2} parent=5 // pred_region
      %s493 = ssub.s32 %s12, 2
      // Predicated region
      $region49: #{rs_gcn_forward.2} parent=47 // pred_check
        %p494 = pneg %p125
      $region50: #{rs_gcn_forward.2} parent=47 // pred_check_branch
        %496 = sbr.rel (%p494) target = $region52
      $region51: #{rs_gcn_forward.2} parent=47 // pred_region
        %s497 = smul.u32 4, %s24
        %p498 = scmp.lt.s32.totalorder %s23, 1
        %s499 = scalar_select %p498, %s23, 1
        %p500 = scmp.lt.s32.totalorder %s497, 3
        %s501 = scalar_select %p500, %s497, 3
        %s502 = smul.addr %s499, 4
        %s503 = sadd.s32 %s501, %s502
        %s504 = smul.addr %s503, 4
        %s505 = scalar_lea.vmem %s3, %s504
      $region52: #{rs_gcn_forward.2} parent=47 // pred_fallthru
        _
      // Predicated region
      $region53: #{rs_gcn_forward.2} parent=47 // pred_check
        %p506 = pneg %p153
      $region54: #{rs_gcn_forward.2} parent=47 // pred_check_branch
        %508 = sbr.rel (%p506) target = $region56
      $region55: #{rs_gcn_forward.2} parent=47 // pred_region
        %s509 = smul.u32 4, %s24
        %p510 = scmp.lt.s32.totalorder %s23, 1
        %s511 = scalar_select %p510, %s23, 1
        %p512 = scmp.lt.s32.totalorder %s509, 3
        %s513 = scalar_select %p512, %s509, 3
        %s514 = smul.addr %s511, 4
        %s515 = sadd.s32 %s513, %s514
        %s516 = smul.addr %s515, 4
        %s517 = scalar_lea.vmem %s4, %s516
      $region56: #{rs_gcn_forward.2} parent=47 // pred_fallthru
        _
      // Predicated region
      $region57: #{rs_gcn_forward.2} parent=47 // pred_check
        %p518 = pneg %p181
      $region58: #{rs_gcn_forward.2} parent=47 // pred_check_branch
        %520 = sbr.rel (%p518) target = $region60
      $region59: #{rs_gcn_forward.2} parent=47 // pred_region
        %s521 = smul.u32 4, %s24
        %p522 = scmp.lt.s32.totalorder %s23, 1
        %s523 = scalar_select %p522, %s23, 1
        %p524 = scmp.lt.s32.totalorder %s521, 3
        %s525 = scalar_select %p524, %s521, 3
        %s526 = smul.addr %s523, 4
        %s527 = sadd.s32 %s525, %s526
        %s528 = smul.addr %s527, 4
        %s529 = scalar_lea.vmem %s5, %s528
      $region60: #{rs_gcn_forward.2} parent=47 // pred_fallthru
        _
    $region48: #{rs_gcn_forward.2} parent=5 // pred_fallthru
      _
  $region6: #{rs_gcn_forward.2} parent=0 // loop_footer
    %s16 = sadd.s32 1, %s12
  $region7: #{rs_gcn_forward.2} parent=0 // loop_footer_branch
    %11 = sbr.rel target = $region3
  $region8: #{rs_gcn_forward.2} parent=0 // loop_exit
    _

</llo_original>
